<compile_context>
chip_gen: v5e
topology: v5e:2x2
jax: 0.10.0
libtpu: 0.0.40
codegen_flags: <defaults>
</compile_context>

<pallas_src>
import functools
import math

import jax
import jax.numpy as jnp
from jax.experimental import pallas as pl
from jax.experimental.pallas import tpu as pltpu


def _erf_approx(x):
    """erf via A&S 7.1.26 polynomial (f32, max abs err ~1.5e-7)."""
    a1, a2, a3, a4, a5 = (0.254829592, -0.284496736, 1.421413741,
                          -1.453152027, 1.061405429)
    p = 0.3275911
    sgn = jnp.where(x >= 0.0, 1.0, -1.0)
    ax = jnp.abs(x)
    t = 1.0 / (1.0 + p * ax)
    poly = ((((a5 * t + a4) * t + a3) * t + a2) * t + a1) * t
    return sgn * (1.0 - poly * jnp.exp(-ax * ax))


def _lm_head_kernel(x_ref, wt_ref, bt_ref, g_ref, b_ref, wd_ref, bd_ref,
                    out_ref, h_ref, *, ln_eps):
    # x_ref : (tm, H)   row tile of flattened hidden states (compute dtype)
    # wt_ref: (H, H)    transform dense weight, pre-transposed (y = x @ wt)
    # bt_ref: (1, H)    transform dense bias (f32)
    # g_ref : (1, H)    LayerNorm gamma (f32)
    # b_ref : (1, H)    LayerNorm beta (f32)
    # wd_ref: (H, tv)   decoder weight tile, pre-transposed (logits = h @ wd)
    # bd_ref: (1, tv)   decoder bias tile (f32)
    # out_ref: (tm, tv) logits tile
    # h_ref : VMEM (tm, H) scratch -- transformed hidden, reused across vocab tiles

    # The transform only depends on the row tile: compute it once per row tile
    # (vocab axis is innermost and "arbitrary", so j == 0 runs first).
    @pl.when(pl.program_id(1) == 0)
    def _():
        x = x_ref[...]
        h = jnp.dot(x, wt_ref[...], preferred_element_type=jnp.float32)
        h = h + bt_ref[...]
        # exact GELU: x * 0.5 * (1 + erf(x / sqrt(2)))
        h = h * 0.5 * (1.0 + _erf_approx(h * (1.0 / math.sqrt(2.0))))
        # BertLayerNorm(eps=1e-12), all in f32.
        mu = jnp.mean(h, axis=-1, keepdims=True)
        d = h - mu
        var = jnp.mean(d * d, axis=-1, keepdims=True)
        h = d * jax.lax.rsqrt(var + ln_eps)
        h = h * g_ref[...] + b_ref[...]
        h_ref[...] = h.astype(h_ref.dtype)

    # decoder: (tm, H) x (H, tv) -> (tm, tv); plain MXU matmul, no transpose.
    logits = jnp.dot(h_ref[...], wd_ref[...], preferred_element_type=jnp.float32)
    out_ref[...] = (logits + bd_ref[...]).astype(out_ref.dtype)


def bert_lm_prediction_head(hidden_states, transform_w, transform_b,
                            ln_gamma, ln_beta, decoder_w, decoder_b,
                            *, block_rows=1024, block_vocab=1024,
                            ln_eps=1e-12, compute_dtype=jnp.bfloat16,
                            out_dtype=None, vmem_limit_bytes=None):
    """BertLMPredictionHead forward.

    hidden_states: (B, S, H)
    transform_w  : (H, H)   nn.Linear weight in PyTorch (out, in) layout
    transform_b  : (H,)
    ln_gamma     : (H,)
    ln_beta      : (H,)
    decoder_w    : (V, H)   tied embedding matrix (nn.Linear weight, no bias)
    decoder_b    : (V,)     separate bias parameter
    returns logits (B, S, V) in out_dtype (default: hidden_states.dtype)
    """
    B, S, H = hidden_states.shape
    V = decoder_w.shape[0]
    N = B * S

    if compute_dtype is None:
        compute_dtype = hidden_states.dtype
    if out_dtype is None:
        out_dtype = hidden_states.dtype

    # Activations and matmul weights in compute_dtype (bf16 by default);
    # biases / LN params stay f32 (they are added to f32 accumulators).
    x = hidden_states.reshape(N, H).astype(compute_dtype)
    wt = transform_w.T.astype(compute_dtype)          # (H_in, H_out)
    bt = transform_b.reshape(1, H).astype(jnp.float32)
    g = ln_gamma.reshape(1, H).astype(jnp.float32)
    b = ln_beta.reshape(1, H).astype(jnp.float32)
    # One-off "weight-load time" layout change: (V, H) -> (H, V), so the kernel
    # never needs a per-step XLU transpose.  Callers should cache this.
    wd = decoder_w.T.astype(compute_dtype)             # (H, V)
    bd = decoder_b.reshape(1, V).astype(jnp.float32)

    tm = min(block_rows, N)
    tv = min(block_vocab, V)
    grid = (pl.cdiv(N, tm), pl.cdiv(V, tv))

    if vmem_limit_bytes is None:
        cb = jnp.dtype(compute_dtype).itemsize
        ob = jnp.dtype(out_dtype).itemsize
        est = (2 * tm * H * cb          # x tile (double-buffered)
               + 2 * H * H * cb         # transform weight
               + 2 * H * tv * cb        # decoder weight tile
               + 2 * tm * tv * ob       # output tile
               + tm * H * cb            # h scratch
               + 16 * H * 4 + 4 * tv * 4)
        vmem_limit_bytes = max(32 * 1024 * 1024,
                               min(100 * 1024 * 1024, int(est * 1.25) + (2 << 20)))

    kernel = functools.partial(_lm_head_kernel, ln_eps=ln_eps)

    out = pl.pallas_call(
        kernel,
        out_shape=jax.ShapeDtypeStruct((N, V), out_dtype),
        grid_spec=pltpu.PrefetchScalarGridSpec(
            num_scalar_prefetch=0,
            grid=grid,
            in_specs=[
                pl.BlockSpec((tm, H), lambda i, j: (i, 0)),   # hidden rows
                pl.BlockSpec((H, H), lambda i, j: (0, 0)),    # transform W^T
                pl.BlockSpec((1, H), lambda i, j: (0, 0)),    # transform bias
                pl.BlockSpec((1, H), lambda i, j: (0, 0)),    # LN gamma
                pl.BlockSpec((1, H), lambda i, j: (0, 0)),    # LN beta
                pl.BlockSpec((H, tv), lambda i, j: (0, j)),   # decoder W^T (H, V)
                pl.BlockSpec((1, tv), lambda i, j: (0, j)),   # decoder bias
            ],
            out_specs=pl.BlockSpec((tm, tv), lambda i, j: (i, j)),
            scratch_shapes=[pltpu.VMEM((tm, H), compute_dtype)],
        ),
        compiler_params=pltpu.CompilerParams(
            dimension_semantics=("parallel", "arbitrary"),
            vmem_limit_bytes=vmem_limit_bytes,
        ),
    )(x, wt, bt, g, b, wd, bd)

    return out.reshape(B, S, V)


def _reference(hidden_states, transform_w, transform_b, ln_gamma, ln_beta,
               decoder_w, decoder_b, ln_eps=1e-12):
    hp = jax.lax.Precision.HIGHEST
    x = hidden_states.astype(jnp.float32)
    h = jnp.dot(x, transform_w.T.astype(jnp.float32), precision=hp) + transform_b
    h = h * 0.5 * (1.0 + jax.lax.erf(h / math.sqrt(2.0)))
    mu = jnp.mean(h, axis=-1, keepdims=True)
    var = jnp.mean((h - mu) ** 2, axis=-1, keepdims=True)
    h = (h - mu) / jnp.sqrt(var + ln_eps) * ln_gamma + ln_beta
    return jnp.dot(h, decoder_w.T.astype(jnp.float32), precision=hp) + decoder_b


def _make_params(key, B, S, H, V):
    k_x, k_tw, k_tb, k_g, k_b, k_dw, k_db = jax.random.split(key, 7)
    hidden_states = jax.random.normal(k_x, (B, S, H), dtype=jnp.float32)
    transform_w = jax.random.normal(k_tw, (H, H), dtype=jnp.float32) * 0.02
    transform_b = jax.random.normal(k_tb, (H,), dtype=jnp.float32) * 0.02
    ln_gamma = 1.0 + jax.random.normal(k_g, (H,), dtype=jnp.float32) * 0.02
    ln_beta = jax.random.normal(k_b, (H,), dtype=jnp.float32) * 0.02
    decoder_w = jax.random.normal(k_dw, (V, H), dtype=jnp.float32) * 0.02
    decoder_b = jax.random.normal(k_db, (V,), dtype=jnp.float32) * 0.02
    return (hidden_states, transform_w, transform_b, ln_gamma, ln_beta,
            decoder_w, decoder_b)


if __name__ == "__main__":
    key = jax.random.PRNGKey(0)
    k1, k2 = jax.random.split(key)

    # ---- Test 1: full-precision path, tight tolerance ----
    B, S, H, V = 2, 8, 32, 512
    params = _make_params(k1, B, S, H, V)
    out_f32 = bert_lm_prediction_head(
        *params, block_rows=16, block_vocab=128, compute_dtype=jnp.float32)
    out_f32 = jax.block_until_ready(out_f32)
    ref = _reference(*params).reshape(B, S, V)
    assert out_f32.shape == (B, S, V)
    err = float(jnp.max(jnp.abs(out_f32 - ref)))
    assert jnp.allclose(out_f32, ref, atol=2e-3, rtol=2e-3), f"f32 max_err={err}"

    # ---- Test 2: default bf16 compute path (MXU-friendly), loose tolerance ----
    out_bf = bert_lm_prediction_head(*params, block_rows=16, block_vocab=128)
    out_bf = jax.block_until_ready(out_bf)
    err = float(jnp.max(jnp.abs(out_bf - ref)))
    assert jnp.allclose(out_bf, ref, atol=2e-2, rtol=5e-2), f"bf16 max_err={err}"

    # ---- Test 3: non-divisible N and V (edge-tile masking), bf16 path ----
    B2, S2, H2, V2 = 2, 5, 32, 384
    params2 = _make_params(k2, B2, S2, H2, V2)
    out2 = bert_lm_prediction_head(*params2, block_rows=8, block_vocab=256)
    out2 = jax.block_until_ready(out2)
    ref2 = _reference(*params2).reshape(B2, S2, V2)
    err2 = float(jnp.max(jnp.abs(out2 - ref2)))
    assert out2.shape == (B2, S2, V2)
    assert jnp.allclose(out2, ref2, atol=2e-2, rtol=5e-2), f"edge max_err={err2}"

    print("KERNEL_OK")
</pallas_src>

<mosaic_0001>
module attributes {stable_mosaic.version = 11 : i64} {
  func.func @_lm_head_kernel(%arg0: i32, %arg1: i32, %arg2: memref<16x32xf32, #tpu.memory_space<vmem>>, %arg3: memref<32x32xf32, #tpu.memory_space<vmem>>, %arg4: memref<1x32xf32, #tpu.memory_space<vmem>>, %arg5: memref<1x32xf32, #tpu.memory_space<vmem>>, %arg6: memref<1x32xf32, #tpu.memory_space<vmem>>, %arg7: memref<32x128xf32, #tpu.memory_space<vmem>>, %arg8: memref<1x128xf32, #tpu.memory_space<vmem>>, %arg9: memref<16x128xf32, #tpu.memory_space<vmem>>, %arg10: memref<16x32xf32, #tpu.memory_space<vmem>>) attributes {dimension_semantics = [#tpu.dimension_semantics<parallel>, #tpu.dimension_semantics<arbitrary>], iteration_bounds = array<i64: 1, 4>, scalar_prefetch = 0 : i64, scratch_operands = 1 : i64, tpu.core_type = #tpu.core_type<tc>, window_params = [{transform_indices = @transform_0, window_bounds = array<i64: 16, 32>}, {pipeline_mode = #tpu.pipeline_mode<synchronous>, transform_indices = @transform_1, window_bounds = array<i64: 32, 32>}, {pipeline_mode = #tpu.pipeline_mode<synchronous>, transform_indices = @transform_2, window_bounds = array<i64: 1, 32>}, {pipeline_mode = #tpu.pipeline_mode<synchronous>, transform_indices = @transform_3, window_bounds = array<i64: 1, 32>}, {pipeline_mode = #tpu.pipeline_mode<synchronous>, transform_indices = @transform_4, window_bounds = array<i64: 1, 32>}, {transform_indices = @transform_5, window_bounds = array<i64: 32, 128>}, {transform_indices = @transform_6, window_bounds = array<i64: 1, 128>}, {transform_indices = @transform_7, window_bounds = array<i64: 16, 128>}]} {
    %c0_i32 = arith.constant 0 : i32
    %0 = arith.cmpi eq, %arg1, %c0_i32 : i32
    %1 = arith.extui %0 : i1 to i32
    %c0_i32_0 = arith.constant 0 : i32
    %2 = arith.cmpi ne, %1, %c0_i32_0 : i32
    scf.if %2 {
      %c0_8 = arith.constant 0 : index
      %c0_9 = arith.constant 0 : index
      %10 = vector.load %arg2[%c0_8, %c0_9] : memref<16x32xf32, #tpu.memory_space<vmem>>, vector<16x32xf32>
      %c0_10 = arith.constant 0 : index
      %c0_11 = arith.constant 0 : index
      %11 = vector.load %arg3[%c0_10, %c0_11] : memref<32x32xf32, #tpu.memory_space<vmem>>, vector<32x32xf32>
      %cst_12 = arith.constant dense<0.000000e+00> : vector<16x32xf32>
      %12 = tpu.matmul %10, %11, %cst_12 {dimension_numbers = #tpu.dot_dimension_numbers<[1], [0], [0], [1], [0, 0, 1, 1], [], []>} : vector<16x32xf32>, vector<32x32xf32>, vector<16x32xf32> -> vector<16x32xf32>
      %c0_13 = arith.constant 0 : index
      %c0_14 = arith.constant 0 : index
      %13 = vector.load %arg4[%c0_13, %c0_14] : memref<1x32xf32, #tpu.memory_space<vmem>>, vector<1x32xf32>
      %14 = vector.broadcast %13 : vector<1x32xf32> to vector<16x32xf32>
      %15 = arith.addf %12, %14 : vector<16x32xf32>
      %cst_15 = arith.constant 5.000000e-01 : f32
      %16 = vector.broadcast %cst_15 : f32 to vector<16x32xf32>
      %17 = arith.mulf %15, %16 : vector<16x32xf32>
      %cst_16 = arith.constant 0.707106769 : f32
      %18 = vector.broadcast %cst_16 : f32 to vector<16x32xf32>
      %19 = arith.mulf %15, %18 : vector<16x32xf32>
      %cst_17 = arith.constant 0.000000e+00 : f32
      %20 = vector.broadcast %cst_17 : f32 to vector<16x32xf32>
      %21 = arith.cmpf oge, %19, %20 : vector<16x32xf32>
      %cst_18 = arith.constant 1.000000e+00 : f32
      %cst_19 = arith.constant -1.000000e+00 : f32
      %22 = vector.broadcast %cst_18 : f32 to vector<16x32xf32>
      %23 = vector.broadcast %cst_19 : f32 to vector<16x32xf32>
      %24 = arith.select %21, %22, %23 : vector<16x32xi1>, vector<16x32xf32>
      %25 = math.absf %19 : vector<16x32xf32>
      %cst_20 = arith.constant 0.327591091 : f32
      %26 = vector.broadcast %cst_20 : f32 to vector<16x32xf32>
      %27 = arith.mulf %26, %25 : vector<16x32xf32>
      %cst_21 = arith.constant 1.000000e+00 : f32
      %28 = vector.broadcast %cst_21 : f32 to vector<16x32xf32>
      %29 = arith.addf %28, %27 : vector<16x32xf32>
      %cst_22 = arith.constant 1.000000e+00 : f32
      %30 = vector.broadcast %cst_22 : f32 to vector<16x32xf32>
      %31 = arith.divf %30, %29 : vector<16x32xf32>
      %cst_23 = arith.constant 1.06140542 : f32
      %32 = vector.broadcast %cst_23 : f32 to vector<16x32xf32>
      %33 = arith.mulf %32, %31 : vector<16x32xf32>
      %cst_24 = arith.constant -1.45315206 : f32
      %34 = vector.broadcast %cst_24 : f32 to vector<16x32xf32>
      %35 = arith.addf %33, %34 : vector<16x32xf32>
      %36 = arith.mulf %35, %31 : vector<16x32xf32>
      %cst_25 = arith.constant 1.42141378 : f32
      %37 = vector.broadcast %cst_25 : f32 to vector<16x32xf32>
      %38 = arith.addf %36, %37 : vector<16x32xf32>
      %39 = arith.mulf %38, %31 : vector<16x32xf32>
      %cst_26 = arith.constant -0.284496725 : f32
      %40 = vector.broadcast %cst_26 : f32 to vector<16x32xf32>
      %41 = arith.addf %39, %40 : vector<16x32xf32>
      %42 = arith.mulf %41, %31 : vector<16x32xf32>
      %cst_27 = arith.constant 0.254829586 : f32
      %43 = vector.broadcast %cst_27 : f32 to vector<16x32xf32>
      %44 = arith.addf %42, %43 : vector<16x32xf32>
      %45 = arith.mulf %44, %31 : vector<16x32xf32>
      %cst_28 = arith.constant 0.000000e+00 : f32
      %46 = vector.broadcast %cst_28 : f32 to vector<16x32xf32>
      %47 = arith.subf %46, %25 : vector<16x32xf32>
      %48 = arith.mulf %47, %25 : vector<16x32xf32>
      %49 = math.exp %48 : vector<16x32xf32>
      %50 = arith.mulf %45, %49 : vector<16x32xf32>
      %cst_29 = arith.constant 1.000000e+00 : f32
      %51 = vector.broadcast %cst_29 : f32 to vector<16x32xf32>
      %52 = arith.subf %51, %50 : vector<16x32xf32>
      %53 = arith.mulf %24, %52 : vector<16x32xf32>
      %cst_30 = arith.constant 1.000000e+00 : f32
      %54 = vector.broadcast %cst_30 : f32 to vector<16x32xf32>
      %55 = arith.addf %54, %53 : vector<16x32xf32>
      %56 = arith.mulf %17, %55 : vector<16x32xf32>
      %cst_31 = arith.constant dense<0.000000e+00> : vector<16xf32>
      %57 = vector.multi_reduction <add>, %56, %cst_31 [1] : vector<16x32xf32> to vector<16xf32>
      %58 = vector.shape_cast %57 : vector<16xf32> to vector<16x1xf32>
      %cst_32 = arith.constant 3.200000e+01 : f32
      %59 = vector.broadcast %cst_32 : f32 to vector<16x1xf32>
      %60 = arith.divf %58, %59 : vector<16x1xf32>
      %61 = vector.broadcast %60 : vector<16x1xf32> to vector<16x32xf32>
      %62 = arith.subf %56, %61 : vector<16x32xf32>
      %63 = arith.mulf %62, %62 : vector<16x32xf32>
      %cst_33 = arith.constant dense<0.000000e+00> : vector<16xf32>
      %64 = vector.multi_reduction <add>, %63, %cst_33 [1] : vector<16x32xf32> to vector<16xf32>
      %65 = vector.shape_cast %64 : vector<16xf32> to vector<16x1xf32>
      %cst_34 = arith.constant 3.200000e+01 : f32
      %66 = vector.broadcast %cst_34 : f32 to vector<16x1xf32>
      %67 = arith.divf %65, %66 : vector<16x1xf32>
      %cst_35 = arith.constant 9.99999996E-13 : f32
      %68 = vector.broadcast %cst_35 : f32 to vector<16x1xf32>
      %69 = arith.addf %67, %68 : vector<16x1xf32>
      %70 = math.rsqrt %69 : vector<16x1xf32>
      %71 = vector.broadcast %70 : vector<16x1xf32> to vector<16x32xf32>
      %72 = arith.mulf %62, %71 : vector<16x32xf32>
      %c0_36 = arith.constant 0 : index
      %c0_37 = arith.constant 0 : index
      %73 = vector.load %arg5[%c0_36, %c0_37] : memref<1x32xf32, #tpu.memory_space<vmem>>, vector<1x32xf32>
      %74 = vector.broadcast %73 : vector<1x32xf32> to vector<16x32xf32>
      %75 = arith.mulf %72, %74 : vector<16x32xf32>
      %c0_38 = arith.constant 0 : index
      %c0_39 = arith.constant 0 : index
      %76 = vector.load %arg6[%c0_38, %c0_39] : memref<1x32xf32, #tpu.memory_space<vmem>>, vector<1x32xf32>
      %77 = vector.broadcast %76 : vector<1x32xf32> to vector<16x32xf32>
      %78 = arith.addf %75, %77 : vector<16x32xf32>
      %c0_40 = arith.constant 0 : index
      %c0_41 = arith.constant 0 : index
      %79 = vector.load %arg10[%c0_40, %c0_41] : memref<16x32xf32, #tpu.memory_space<vmem>>, vector<16x32xf32>
      tpu.vector_store %arg10[%c0_40, %c0_41], %78 {strides = array<i32>} : memref<16x32xf32, #tpu.memory_space<vmem>>, vector<16x32xf32>,
    } else {
    }
    %c0 = arith.constant 0 : index
    %c0_1 = arith.constant 0 : index
    %3 = vector.load %arg10[%c0, %c0_1] : memref<16x32xf32, #tpu.memory_space<vmem>>, vector<16x32xf32>
    %c0_2 = arith.constant 0 : index
    %c0_3 = arith.constant 0 : index
    %4 = vector.load %arg7[%c0_2, %c0_3] : memref<32x128xf32, #tpu.memory_space<vmem>>, vector<32x128xf32>
    %cst = arith.constant dense<0.000000e+00> : vector<16x128xf32>
    %5 = tpu.matmul %3, %4, %cst {dimension_numbers = #tpu.dot_dimension_numbers<[1], [0], [0], [1], [0, 0, 1, 1], [], []>} : vector<16x32xf32>, vector<32x128xf32>, vector<16x128xf32> -> vector<16x128xf32>
    %c0_4 = arith.constant 0 : index
    %c0_5 = arith.constant 0 : index
    %6 = vector.load %arg8[%c0_4, %c0_5] : memref<1x128xf32, #tpu.memory_space<vmem>>, vector<1x128xf32>
    %7 = vector.broadcast %6 : vector<1x128xf32> to vector<16x128xf32>
    %8 = arith.addf %5, %7 : vector<16x128xf32>
    %c0_6 = arith.constant 0 : index
    %c0_7 = arith.constant 0 : index
    %9 = vector.load %arg9[%c0_6, %c0_7] : memref<16x128xf32, #tpu.memory_space<vmem>>, vector<16x128xf32>
    tpu.vector_store %arg9[%c0_6, %c0_7], %8 {strides = array<i32>} : memref<16x128xf32, #tpu.memory_space<vmem>>, vector<16x128xf32>,
    return
  }
  func.func @transform_0(%arg0: i32, %arg1: i32) -> (i32, i32) {
    %c0_i32 = arith.constant 0 : i32
    %c0_i32_0 = arith.constant 0 : i32
    return %arg0, %c0_i32 : i32, i32
  }
  func.func @transform_1(%arg0: i32, %arg1: i32) -> (i32, i32) {
    %c0_i32 = arith.constant 0 : i32
    %c0_i32_0 = arith.constant 0 : i32
    %c0_i32_1 = arith.constant 0 : i32
    return %c0_i32, %c0_i32_0 : i32, i32
  }
  func.func @transform_2(%arg0: i32, %arg1: i32) -> (i32, i32) {
    %c0_i32 = arith.constant 0 : i32
    %c0_i32_0 = arith.constant 0 : i32
    %c0_i32_1 = arith.constant 0 : i32
    return %c0_i32, %c0_i32_0 : i32, i32
  }
  func.func @transform_3(%arg0: i32, %arg1: i32) -> (i32, i32) {
    %c0_i32 = arith.constant 0 : i32
    %c0_i32_0 = arith.constant 0 : i32
    %c0_i32_1 = arith.constant 0 : i32
    return %c0_i32, %c0_i32_0 : i32, i32
  }
  func.func @transform_4(%arg0: i32, %arg1: i32) -> (i32, i32) {
    %c0_i32 = arith.constant 0 : i32
    %c0_i32_0 = arith.constant 0 : i32
    %c0_i32_1 = arith.constant 0 : i32
    return %c0_i32, %c0_i32_0 : i32, i32
  }
  func.func @transform_5(%arg0: i32, %arg1: i32) -> (i32, i32) {
    %c0_i32 = arith.constant 0 : i32
    %c0_i32_0 = arith.constant 0 : i32
    return %c0_i32, %arg1 : i32, i32
  }
  func.func @transform_6(%arg0: i32, %arg1: i32) -> (i32, i32) {
    %c0_i32 = arith.constant 0 : i32
    %c0_i32_0 = arith.constant 0 : i32
    return %c0_i32, %arg1 : i32, i32
  }
  func.func @transform_7(%arg0: i32, %arg1: i32) -> (i32, i32) {
    %c0_i32 = arith.constant 0 : i32
    return %arg0, %arg1 : i32, i32
  }
}

</mosaic_0001>

<llo_original>
// kernel: tpu_custom_call.1
$region0: #{tpu_custom_call.1}
  #allocation0 [shape = 'u32[]', space=smem, size = 0x4, offset = 0x4, fixed_abs, tag = 'smem constant byte address 0x4 - core index']
  #allocation1 [shape = 'u32[72,128]{1,0:T(1,128)}', space=vmem, size = 0x9000, scoped, tag = 'internal scratch']
  #allocation2 [shape = 'f32[16,32]{1,0:T(8,128)}', space=vmem, size = 0x2000, scoped, tag = 'scratch operand']
  %s0 = inlined_call_operand.hbm [shape: f32[16,32], index: 0, kind: input, shape index: {}]
  %s1 = inlined_call_operand.hbm [shape: f32[32,32], index: 1, kind: input, shape index: {}]
  %s2 = inlined_call_operand.vmem [shape: f32[1,32], index: 2, kind: input, shape index: {}]
  %s3 = inlined_call_operand.hbm [shape: f32[1,32], index: 3, kind: input, shape index: {}]
  %s4 = inlined_call_operand.hbm [shape: f32[1,32], index: 4, kind: input, shape index: {}]
  %s5 = inlined_call_operand.hbm [shape: f32[32,512], index: 5, kind: input, shape index: {}]
  %s6 = inlined_call_operand.vmem [shape: f32[1,512], index: 6, kind: input, shape index: {}]
  %s7 = inlined_call_operand.hbm [shape: f32[16,512], index: 7, kind: output, shape index: {}]
  %s8 = sld [smem:[#allocation0]]
  $region85: #{tpu_custom_call.1} parent=0
    _
  %s10 = ssub.s32 1, %s8
  %s11 = scalar_select 0, %s10, %s8
  $region1: #{tpu_custom_call.1} parent=0
    #allocation3 [shape = 'u8[8192]{0}', space=vmem, size = 0x2000, scoped, tag = 'input window, operand 0, single buffered']
    #allocation4 [shape = 's32[2]{0}', space=sflag, size = 0x8, scoped, tag = 'scoped memory for tpu_custom_call.1']
    #allocation5 [shape = 's32[2]{0}', space=sflag, size = 0x8, scoped, tag = 'scoped memory for tpu_custom_call.1']
    #allocation6 [shape = 'u8[16384]{0}', space=vmem, size = 0x4000, scoped, tag = 'input window, operand 1, single buffered']
    #allocation7 [shape = 's32[1]{0}', space=sflag, size = 0x4, scoped, tag = 'scoped memory for tpu_custom_call.1']
    #allocation8 [shape = 'u8[512]{0}', space=vmem, size = 0x400, scoped, tag = 'input window, operand 3, single buffered']
    #allocation9 [shape = 'u8[512]{0}', space=vmem, size = 0x400, scoped, tag = 'input window, operand 4, single buffered']
    #allocation10 [shape = 's32[1]{0}', space=sflag, size = 0x4, scoped, tag = 'scoped memory for tpu_custom_call.1']
    #allocation11 [shape = 'u8[32768]{0}', space=vmem, size = 0x8000, scoped, tag = 'input window, operand 5']
    #allocation12 [shape = 'u8[16384]{0}', space=vmem, size = 0x4000, scoped, tag = 'output window, operand 0']
    %12 = vsyncpa [#allocation4], 0
    %13 = vsyncpa [#allocation7], 0
    %14 = vsyncpa [#allocation10], 0
    %15 = vsyncpa [#allocation5], 0
    %s16 = scalar_lea.sflag [#allocation5], 1
    %17 = vsyncpa %s16, 0
    loop: start=0, step=1, limit=6
    $region2: #{tpu_custom_call.1} parent=1 // loop_pre_header
      _
    $region3: #{tpu_custom_call.1} parent=1 // loop_header
      %s19 = sphi 0, %s23
      %p20 = scmp.ge.s32.totalorder %s19, 6
      %s26 = sphi 0, %s38
      %s27 = sphi 0, %s34
      %s28 = sphi 0, %s26
      %s29 = sphi 0, %s27
      %s30 = sphi 0, %s28
      %s31 = sphi 0, %s29
      %s41 = sphi 0, %s43
      %s44 = sphi 0, %s41
      %s45 = sphi 0, %s44
      %s61 = sphi 0, %s45
      %s65 = sphi 0, %s65
      %s67 = sphi 0, %s65
      %s68 = sphi 0, %s67
      %s82 = sphi 0, %s68
      %s86 = sphi 0, %s86
      %s88 = sphi 0, %s86
      %s89 = sphi 0, %s88
      %s103 = sphi 0, %s89
      %s107 = sphi 0, %s107
      %s109 = sphi 0, %s107
      %s110 = sphi 0, %s109
      %s124 = sphi 0, %s110
      %s128 = sphi 0, %s128
      %s130 = sphi 0, %s128
      %s131 = sphi 0, %s130
      %s145 = sphi 0, %s131
      %s151 = sphi 0, %s153
      %s154 = sphi 0, %s151
      %s155 = sphi 0, %s154
      %s171 = sphi 0, %s155
      %s177 = sphi 0, %s179
      %s180 = sphi 0, %s177
      %s181 = sphi 0, %s180
      %s197 = sphi 0, %s181
      %s205 = sphi 0, %s207
      %s208 = sphi 0, %s205
      %s209 = sphi 0, %s208
      %s225 = sphi 0, %s209
    $region4: #{tpu_custom_call.1} parent=1 // loop_header_branch
      %22 = sbr.rel (%p20) target = $region8
    $region5: #{tpu_custom_call.1} parent=1 // loop_body
      %s24 = ssub.s32 %s19, 1
      %s25 = ssub.s32 %s19, 2
      %s32 = sadd.s32 1, %s27
      %p33 = scmp.ge.s32.totalorder %s32, 4
      %s34 = scalar_select %p33, 0, %s32
      %s35 = sadd.s32 1, %s26
      %s36 = scalar_select %p33, %s35, %s26
      %p37 = scmp.ge.s32.totalorder %s36, 1
      %s38 = scalar_select %p37, 0, %s36
      %s39 = ssub.s32 %s26, %s38
      %p40 = scmp.eq.s32.totalorder %s39, 0
      %s42 = sadd.s32 %s41, 1
      %s43 = scalar_select %p40, %s41, %s42
      %p46 = pneg %p40
      %p47 = scmp.eq.s32.totalorder %s19, 3
      %p48 = por %p46, %p47
      %p49 = scmp.ne.s32.totalorder %s41, %s44
      %p50 = scmp.eq.s32.totalorder %s19, 0
      %p51 = por %p49, %p50
      %p52 = scmp.ne.s32.totalorder %s41, %s44
      %p53 = scmp.eq.s32.totalorder %s24, 3
      %p54 = por %p52, %p53
      %p55 = scmp.ne.s32.totalorder %s44, %s45
      %p56 = scmp.eq.s32.totalorder %s24, 0
      %p57 = por %p55, %p56
      %p58 = scmp.ne.s32.totalorder %s44, %s45
      %p59 = scmp.eq.s32.totalorder %s25, 3
      %p60 = por %p58, %p59
      %p62 = scmp.ne.s32.totalorder %s45, %s61
      %p63 = scmp.eq.s32.totalorder %s25, 0
      %p64 = por %p62, %p63
      %s66 = sadd.s32 %s65, 1
      %p69 = scmp.eq.s32.totalorder %s19, 3
      %p70 = scmp.ne.s32.totalorder %s65, %s67
      %p71 = scmp.eq.s32.totalorder %s19, 0
      %p72 = por %p70, %p71
      %p73 = scmp.ne.s32.totalorder %s65, %s67
      %p74 = scmp.eq.s32.totalorder %s24, 3
      %p75 = por %p73, %p74
      %p76 = scmp.ne.s32.totalorder %s67, %s68
      %p77 = scmp.eq.s32.totalorder %s24, 0
      %p78 = por %p76, %p77
      %p79 = scmp.ne.s32.totalorder %s67, %s68
      %p80 = scmp.eq.s32.totalorder %s25, 3
      %p81 = por %p79, %p80
      %p83 = scmp.ne.s32.totalorder %s68, %s82
      %p84 = scmp.eq.s32.totalorder %s25, 0
      %p85 = por %p83, %p84
      %s87 = sadd.s32 %s86, 1
      %p90 = scmp.eq.s32.totalorder %s19, 3
      %p91 = scmp.ne.s32.totalorder %s86, %s88
      %p92 = scmp.eq.s32.totalorder %s19, 0
      %p93 = por %p91, %p92
      %p94 = scmp.ne.s32.totalorder %s86, %s88
      %p95 = scmp.eq.s32.totalorder %s24, 3
      %p96 = por %p94, %p95
      %p97 = scmp.ne.s32.totalorder %s88, %s89
      %p98 = scmp.eq.s32.totalorder %s24, 0
      %p99 = por %p97, %p98
      %p100 = scmp.ne.s32.totalorder %s88, %s89
      %p101 = scmp.eq.s32.totalorder %s25, 3
      %p102 = por %p100, %p101
      %p104 = scmp.ne.s32.totalorder %s89, %s103
      %p105 = scmp.eq.s32.totalorder %s25, 0
      %p106 = por %p104, %p105
      %s108 = sadd.s32 %s107, 1
      %p111 = scmp.eq.s32.totalorder %s19, 3
      %p112 = scmp.ne.s32.totalorder %s107, %s109
      %p113 = scmp.eq.s32.totalorder %s19, 0
      %p114 = por %p112, %p113
      %p115 = scmp.ne.s32.totalorder %s107, %s109
      %p116 = scmp.eq.s32.totalorder %s24, 3
      %p117 = por %p115, %p116
      %p118 = scmp.ne.s32.totalorder %s109, %s110
      %p119 = scmp.eq.s32.totalorder %s24, 0
      %p120 = por %p118, %p119
      %p121 = scmp.ne.s32.totalorder %s109, %s110
      %p122 = scmp.eq.s32.totalorder %s25, 3
      %p123 = por %p121, %p122
      %p125 = scmp.ne.s32.totalorder %s110, %s124
      %p126 = scmp.eq.s32.totalorder %s25, 0
      %p127 = por %p125, %p126
      %s129 = sadd.s32 %s128, 1
      %p132 = scmp.eq.s32.totalorder %s19, 3
      %p133 = scmp.ne.s32.totalorder %s128, %s130
      %p134 = scmp.eq.s32.totalorder %s19, 0
      %p135 = por %p133, %p134
      %p136 = scmp.ne.s32.totalorder %s128, %s130
      %p137 = scmp.eq.s32.totalorder %s24, 3
      %p138 = por %p136, %p137
      %p139 = scmp.ne.s32.totalorder %s130, %s131
      %p140 = scmp.eq.s32.totalorder %s24, 0
      %p141 = por %p139, %p140
      %p142 = scmp.ne.s32.totalorder %s130, %s131
      %p143 = scmp.eq.s32.totalorder %s25, 3
      %p144 = por %p142, %p143
      %p146 = scmp.ne.s32.totalorder %s131, %s145
      %p147 = scmp.eq.s32.totalorder %s25, 0
      %p148 = por %p146, %p147
      %s149 = ssub.s32 %s27, %s34
      %p150 = scmp.eq.s32.totalorder %s149, 0
      %s152 = sadd.s32 %s151, 1
      %s153 = scalar_select %p150, %s151, %s152
      %p156 = pneg %p150
      %p157 = scmp.eq.s32.totalorder %s19, 3
      %p158 = por %p156, %p157
      %p159 = scmp.ne.s32.totalorder %s151, %s154
      %p160 = scmp.eq.s32.totalorder %s19, 0
      %p161 = por %p159, %p160
      %p162 = scmp.ne.s32.totalorder %s151, %s154
      %p163 = scmp.eq.s32.totalorder %s24, 3
      %p164 = por %p162, %p163
      %p165 = scmp.ne.s32.totalorder %s154, %s155
      %p166 = scmp.eq.s32.totalorder %s24, 0
      %p167 = por %p165, %p166
      %p168 = scmp.ne.s32.totalorder %s154, %s155
      %p169 = scmp.eq.s32.totalorder %s25, 3
      %p170 = por %p168, %p169
      %p172 = scmp.ne.s32.totalorder %s155, %s171
      %p173 = scmp.eq.s32.totalorder %s25, 0
      %p174 = por %p172, %p173
      %s175 = ssub.s32 %s27, %s34
      %p176 = scmp.eq.s32.totalorder %s175, 0
      %s178 = sadd.s32 %s177, 1
      %s179 = scalar_select %p176, %s177, %s178
      %p182 = pneg %p176
      %p183 = scmp.eq.s32.totalorder %s19, 3
      %p184 = por %p182, %p183
      %p185 = scmp.ne.s32.totalorder %s177, %s180
      %p186 = scmp.eq.s32.totalorder %s19, 0
      %p187 = por %p185, %p186
      %p188 = scmp.ne.s32.totalorder %s177, %s180
      %p189 = scmp.eq.s32.totalorder %s24, 3
      %p190 = por %p188, %p189
      %p191 = scmp.ne.s32.totalorder %s180, %s181
      %p192 = scmp.eq.s32.totalorder %s24, 0
      %p193 = por %p191, %p192
      %p194 = scmp.ne.s32.totalorder %s180, %s181
      %p195 = scmp.eq.s32.totalorder %s25, 3
      %p196 = por %p194, %p195
      %p198 = scmp.ne.s32.totalorder %s181, %s197
      %p199 = scmp.eq.s32.totalorder %s25, 0
      %p200 = por %p198, %p199
      %s201 = ssub.s32 %s26, %s38
      %s202 = ssub.s32 %s27, %s34
      %s203 = sor.u32 %s201, %s202
      %p204 = scmp.eq.s32.totalorder %s203, 0
      %s206 = sadd.s32 %s205, 1
      %s207 = scalar_select %p204, %s205, %s206
      %p210 = pneg %p204
      %p211 = scmp.eq.s32.totalorder %s19, 3
      %p212 = por %p210, %p211
      %p213 = scmp.ne.s32.totalorder %s205, %s208
      %p214 = scmp.eq.s32.totalorder %s19, 0
      %p215 = por %p213, %p214
      %p216 = scmp.ne.s32.totalorder %s205, %s208
      %p217 = scmp.eq.s32.totalorder %s24, 3
      %p218 = por %p216, %p217
      %p219 = scmp.ne.s32.totalorder %s208, %s209
      %p220 = scmp.eq.s32.totalorder %s24, 0
      %p221 = por %p219, %p220
      %p222 = scmp.ne.s32.totalorder %s208, %s209
      %p223 = scmp.eq.s32.totalorder %s25, 3
      %p224 = por %p222, %p223
      %p226 = scmp.ne.s32.totalorder %s209, %s225
      %p227 = scmp.eq.s32.totalorder %s25, 0
      %p228 = por %p226, %p227
      %p229 = scmp.le.s32.totalorder 1, %s19
      %p230 = scmp.lt.s32.totalorder %s19, 5
      %p231 = pnand %p229, %p230
      %p232 = pneg %p231
      // Predicated region
      $region9: #{tpu_custom_call.1} parent=5 // pred_check
        _
      $region10: #{tpu_custom_call.1} parent=5 // pred_check_branch
        %234 = sbr.rel (%p231) target = $region12
      $region11: #{tpu_custom_call.1} parent=5 // pred_region
        %s235 = ssub.s32 %s19, 1
        // Predicated region
        $region13: #{tpu_custom_call.1} parent=11 // pred_check
          %p236 = pneg %p57
        $region14: #{tpu_custom_call.1} parent=11 // pred_check_branch
          %238 = sbr.rel (%p236) target = $region16
        $region15: #{tpu_custom_call.1} parent=11 // pred_region
          %s239 = smul.u32 2, %s28
          %241 = vsyncadd [#allocation4], 0
          %s242 = smul.addr %s239, 8
          %s243 = scalar_lea.hbm %s0, %s242
          %s244 = sshll.u32 %s243, 4
          %s245 = int_to_ptr.hbm [resolvable:$true] %s244
          %s246 = sshll.u32 [#allocation3], 4
          %s247 = int_to_ptr.vmem [resolvable:$true] %s246
          %252 = dma.hbm_to_vmem [thread:$0]  %s245, 256, %s247, [#allocation4], 128, 128, 8
        $region16: #{tpu_custom_call.1} parent=11 // pred_fallthru
          _
        // Predicated region
        $region17: #{tpu_custom_call.1} parent=11 // pred_check
          %p253 = pneg %p78
        $region18: #{tpu_custom_call.1} parent=11 // pred_check_branch
          %255 = sbr.rel (%p253) target = $region20
        $region19: #{tpu_custom_call.1} parent=11 // pred_region
          %257 = vsyncadd [#allocation7], 0
          %s258 = sshll.u32 %s1, 4
          %s259 = int_to_ptr.hbm [resolvable:$true] %s258
          %s260 = sshll.u32 [#allocation6], 4
          %s261 = int_to_ptr.vmem [resolvable:$true] %s260
          %266 = dma.hbm_to_vmem [thread:$0]  %s259, 512, %s261, [#allocation7], 128, 128, 8
        $region20: #{tpu_custom_call.1} parent=11 // pred_fallthru
          _
        // Predicated region
        $region21: #{tpu_custom_call.1} parent=11 // pred_check
          %p267 = pneg %p99
        $region22: #{tpu_custom_call.1} parent=11 // pred_check_branch
          %269 = sbr.rel (%p267) target = $region24
        $region23: #{tpu_custom_call.1} parent=11 // pred_region
          _
        $region24: #{tpu_custom_call.1} parent=11 // pred_fallthru
          _
        // Predicated region
        $region25: #{tpu_custom_call.1} parent=11 // pred_check
          %p270 = pneg %p120
        $region26: #{tpu_custom_call.1} parent=11 // pred_check_branch
          %272 = sbr.rel (%p270) target = $region28
        $region27: #{tpu_custom_call.1} parent=11 // pred_region
          %274 = vsyncadd [#allocation7], 0
          %s276 = sshll.u32 %s3, 4
          %s277 = int_to_ptr.hbm [resolvable:$true] %s276
          %s278 = sshll.u32 [#allocation8], 4
          %s279 = int_to_ptr.vmem [resolvable:$true] %s278
          %281 = dma.hbm_to_vmem [thread:$0]  %s277, 16, %s279, [#allocation7]
        $region28: #{tpu_custom_call.1} parent=11 // pred_fallthru
          _
        // Predicated region
        $region29: #{tpu_custom_call.1} parent=11 // pred_check
          %p282 = pneg %p141
        $region30: #{tpu_custom_call.1} parent=11 // pred_check_branch
          %284 = sbr.rel (%p282) target = $region32
        $region31: #{tpu_custom_call.1} parent=11 // pred_region
          %286 = vsyncadd [#allocation10], 0
          %s288 = sshll.u32 %s4, 4
          %s289 = int_to_ptr.hbm [resolvable:$true] %s288
          %s290 = sshll.u32 [#allocation9], 4
          %s291 = int_to_ptr.vmem [resolvable:$true] %s290
          %293 = dma.hbm_to_vmem [thread:$0]  %s289, 16, %s291, [#allocation10]
        $region32: #{tpu_custom_call.1} parent=11 // pred_fallthru
          _
      $region12: #{tpu_custom_call.1} parent=5 // pred_fallthru
        _
      %p294 = scmp.lt.s32.totalorder %s19, 4
      // Predicated region
      $region33: #{tpu_custom_call.1} parent=5 // pred_check
        %p295 = pneg %p294
      $region34: #{tpu_custom_call.1} parent=5 // pred_check_branch
        %297 = sbr.rel (%p295) target = $region36
      $region35: #{tpu_custom_call.1} parent=5 // pred_region
        // Predicated region
        $region37: #{tpu_custom_call.1} parent=35 // pred_check
          %p298 = pneg %p161
        $region38: #{tpu_custom_call.1} parent=35 // pred_check_branch
          %300 = sbr.rel (%p298) target = $region40
        $region39: #{tpu_custom_call.1} parent=35 // pred_region
          %s301 = sand.u32 %s19, 1
          %s302 = scalar_lea.sflag [#allocation4], %s301
          %s303 = sand.u32 %s151, 1
          %s304 = smul.addr %s303, 32
          %s305 = scalar_lea.vmem [#allocation11], %s304
          %307 = vsyncadd %s302, 0
          %s308 = smul.addr %s27, 8
          %s309 = scalar_lea.hbm %s5, %s308
          %s310 = sshll.u32 %s309, 4
          %s311 = int_to_ptr.hbm [resolvable:$true] %s310
          %s312 = sshll.u32 %s305, 4
          %s313 = int_to_ptr.vmem [resolvable:$true] %s312
          %318 = dma.hbm_to_vmem [thread:$0]  %s311, 512, %s313, %s302, 512, 128, 8
        $region40: #{tpu_custom_call.1} parent=35 // pred_fallthru
          _
        // Predicated region
        $region41: #{tpu_custom_call.1} parent=35 // pred_check
          %p319 = pneg %p187
        $region42: #{tpu_custom_call.1} parent=35 // pred_check_branch
          %321 = sbr.rel (%p319) target = $region44
        $region43: #{tpu_custom_call.1} parent=35 // pred_region
          %p322 = scmp.lt.s32.totalorder %s27, 3
          %s323 = scalar_select %p322, %s27, 3
          %s324 = scalar_lea.vmem %s6, %s323
        $region44: #{tpu_custom_call.1} parent=35 // pred_fallthru
          _
      $region36: #{tpu_custom_call.1} parent=5 // pred_fallthru
        _
      %p325 = scmp.le.s32.totalorder 1, %s19
      %p326 = scmp.lt.s32.totalorder %s19, 5
      %p327 = pnand %p325, %p326
      %p328 = pneg %p327
      // Predicated region
      $region45: #{tpu_custom_call.1} parent=5 // pred_check
        _
      $region46: #{tpu_custom_call.1} parent=5 // pred_check_branch
        %330 = sbr.rel (%p327) target = $region48
      $region47: #{tpu_custom_call.1} parent=5 // pred_region
        %s331 = ssub.s32 %s19, 1
        // Predicated region
        $region49: #{tpu_custom_call.1} parent=47 // pred_check
          %p332 = pneg %p57
        $region50: #{tpu_custom_call.1} parent=47 // pred_check_branch
          %334 = sbr.rel (%p332) target = $region52
        $region51: #{tpu_custom_call.1} parent=47 // pred_region
          %336 = dma.done [#allocation4], 256
        $region52: #{tpu_custom_call.1} parent=47 // pred_fallthru
          _
        // Predicated region
        $region53: #{tpu_custom_call.1} parent=47 // pred_check
          %p337 = pneg %p78
        $region54: #{tpu_custom_call.1} parent=47 // pred_check_branch
          %339 = sbr.rel (%p337) target = $region56
        $region55: #{tpu_custom_call.1} parent=47 // pred_region
          %341 = dma.done [#allocation7], 512
        $region56: #{tpu_custom_call.1} parent=47 // pred_fallthru
          _
        // Predicated region
        $region57: #{tpu_custom_call.1} parent=47 // pred_check
          %p342 = pneg %p120
        $region58: #{tpu_custom_call.1} parent=47 // pred_check_branch
          %344 = sbr.rel (%p342) target = $region60
        $region59: #{tpu_custom_call.1} parent=47 // pred_region
          %346 = dma.done [#allocation7], 16
        $region60: #{tpu_custom_call.1} parent=47 // pred_fallthru
          _
        // Predicated region
        $region61: #{tpu_custom_call.1} parent=47 // pred_check
          %p347 = pneg %p141
        $region62: #{tpu_custom_call.1} parent=47 // pred_check_branch
          %349 = sbr.rel (%p347) target = $region64
        $region63: #{tpu_custom_call.1} parent=47 // pred_region
          %351 = dma.done [#allocation10], 16
        $region64: #{tpu_custom_call.1} parent=47 // pred_fallthru
          _
        %s352 = sand.u32 %s24, 1
        %s353 = scalar_lea.sflag [#allocation4], %s352
        %s354 = sand.u32 %s154, 1
        %s355 = smul.addr %s354, 32
        %s356 = scalar_lea.vmem [#allocation11], %s355
        // Predicated region
        $region65: #{tpu_custom_call.1} parent=47 // pred_check
          %p357 = pneg %p167
        $region66: #{tpu_custom_call.1} parent=47 // pred_check_branch
          %359 = sbr.rel (%p357) target = $region68
        $region67: #{tpu_custom_call.1} parent=47 // pred_region
          %361 = dma.done %s353, 512
        $region68: #{tpu_custom_call.1} parent=47 // pred_fallthru
          _
        %p362 = pneg %p57
        %p363 = pneg %p54
        %p364 = pneg %p78
        %p365 = pneg %p75
        %p366 = pneg %p99
        %p367 = pneg %p96
        %p368 = pneg %p120
        %p369 = pneg %p117
        %p370 = pneg %p141
        %p371 = pneg %p138
        %s372 = sand.u32 %s24, 1
        %s373 = scalar_lea.sflag [#allocation4], %s372
        %s374 = sand.u32 %s154, 1
        %s375 = smul.addr %s374, 32
        %s376 = scalar_lea.vmem [#allocation11], %s375
        %p377 = pneg %p167
        %p378 = pneg %p164
        %p379 = scmp.lt.s32.totalorder %s29, 3
        %s380 = scalar_select %p379, %s29, 3
        %s381 = scalar_lea.vmem %s6, %s380
        %p382 = pneg %p193
        %p383 = pneg %p190
        %p384 = pneg %p221
        %p385 = pneg %p218
        %s386 = sand.u32 %s208, 1
        %s387 = scalar_lea.sflag [#allocation5], %s386
        %s388 = sand.u32 %s208, 1
        %s389 = smul.addr %s388, 16
        %s390 = scalar_lea.vmem [#allocation12], %s389
        %s391 = smul.u32 2, %s28
        %p392 = scmp.lt.s32.totalorder %s29, 3
        %s393 = scalar_select %p392, %s29, 3
        %s394 = scalar_lea.vmem %s6, %s393
        %s395 = smul.u32 2, %s28
        %p396 = scmp.eq.s32.totalorder %s29, 0
        // Predicated region
        $region69: #{tpu_custom_call.1} parent=47 // pred_check
          %p397 = pneg %p396
        $region70: #{tpu_custom_call.1} parent=47 // pred_check_branch
          %399 = sbr.rel (%p397) target = $region72
        $region71: #{tpu_custom_call.1} parent=47 // pred_region
          %v400 = vld [vmem:[#allocation3] sm:$0xff]
          %v401 = vld [vmem:[#allocation3 + $0x8] sm:$0xff]
          %v402 = vld [vmem:[#allocation6] sm:$0xff]
          %v403 = vld [vmem:[#allocation6 + $0x8] sm:$0xff]
          %v404 = vld [vmem:[#allocation6 + $0x10] sm:$0xff]
          %v405 = vld [vmem:[#allocation6 + $0x18] sm:$0xff]
          %v406 = vld [vmem:[%s2] sm:$0x1]
          %v408 = vperm.slane %v406, 0
          %vm410 = vcmask 261120
          %v412 = vsel %vm410, %v400, 0
          %v415 = vsel %vm410, %v401, 0
          %417 = vmatpush.msra.mxu0 0.0
          %418 = vmatpush.msra.mxu0 0.0
          %419 = vmatpush.msra.mxu0 0.0
          %420 = vmatpush.msra.mxu0 0.0
          %421 = vmatpush.msra.mxu0 0.0
          %422 = vmatpush.msra.mxu0 0.0
          %423 = vmatpush.msra.mxu0 0.0
          %424 = vmatpush.msra.mxu0 0.0
          %425 = vmatpush.msra.mxu0 0.0
          %426 = vmatpush.msra.mxu0 0.0
          %427 = vmatpush.msra.mxu0 0.0
          %428 = vmatpush.msra.mxu0 0.0
          %429 = vmatpush.msra.mxu0 %v405
          %430 = vmatpush.msra.mxu0 %v404
          %431 = vmatpush.msra.mxu0 %v403
          %432 = vmatpush.msra.mxu0 %v402
          %433 = vmatmul.f32.gmra.mxu0 %v412
          %v434 = vpop.f32.mrf.mxu0
          %v435 = vadd.f32 %v408, %v434
          %436 = vmatmul.f32.gmra.mxu0 %v415
          %v437 = vpop.f32.mrf.mxu0
          %v438 = vadd.f32 %v408, %v437
          %439 = vdwg.mxu0
          %v440 = vmul.f32 %v435, 0.5
          %v441 = vmul.f32 %v438, 0.5
          %v442 = vmul.f32 %v435, 0.70710677
          %v443 = vmul.f32 %v438, 0.70710677
          %vm444 = vcmp.ge.f32.partialorder %v442, 0.0
          %vm445 = vcmp.ge.f32.partialorder %v443, 0.0
          %v446 = vsel %vm444, 1.0, -1.0
          %v447 = vsel %vm445, 1.0, -1.0
          %v448 = vand.u32 2147483647, %v442
          %v449 = vand.u32 2147483647, %v443
          %v450 = vmul.f32 %v448, 0.3275911
          %v451 = vmul.f32 %v449, 0.3275911
          %v452 = vadd.f32 %v450, 1.0
          %v453 = vadd.f32 %v451, 1.0
          %v454 = vrcp.pop %v452
          %v455 = vmul.f32 %v452, %v454
          %v456 = vsub.f32 1.0, %v455
          %v457 = vmul.f32 %v454, %v456
          %v458 = vadd.f32 %v454, %v457
          %vm459 = vweird.f32 %v452
          %vm460 = vweird.f32 %v454
          %vm461 = vmor %vm459, %vm460
          %v462 = vsel %vm461, %v454, %v458
          %v463 = vand.u32 2147483647, %v452
          %vm464 = vcmp.eq.f32.partialorder %v463, 8.507059e+37
          %v465 = vand.u32 %v452, 2147483648
          %v466 = vor.u32 1.1754944e-38, %v465
          %v467 = vsel %vm464, %v466, %v462
          %v468 = vmul.f32 1.0, %v467
          %v469 = vrcp.pop %v453
          %v470 = vmul.f32 %v453, %v469
          %v471 = vsub.f32 1.0, %v470
          %v472 = vmul.f32 %v469, %v471
          %v473 = vadd.f32 %v469, %v472
          %vm474 = vweird.f32 %v453
          %vm475 = vweird.f32 %v469
          %vm476 = vmor %vm474, %vm475
          %v477 = vsel %vm476, %v469, %v473
          %v478 = vand.u32 2147483647, %v453
          %vm479 = vcmp.eq.f32.partialorder %v478, 8.507059e+37
          %v480 = vand.u32 %v453, 2147483648
          %v481 = vor.u32 1.1754944e-38, %v480
          %v482 = vsel %vm479, %v481, %v477
          %v483 = vmul.f32 1.0, %v482
          %v484 = vmul.f32 %v468, 1.0614054
          %v485 = vmul.f32 %v483, 1.0614054
          %v486 = vadd.f32 %v484, -1.4531521
          %v487 = vadd.f32 %v485, -1.4531521
          %v488 = vmul.f32 %v486, %v468
          %v489 = vmul.f32 %v487, %v483
          %v490 = vadd.f32 %v488, 1.4214138
          %v491 = vadd.f32 %v489, 1.4214138
          %v492 = vmul.f32 %v490, %v468
          %v493 = vmul.f32 %v491, %v483
          %v494 = vadd.f32 %v492, -0.28449672
          %v495 = vadd.f32 %v493, -0.28449672
          %v496 = vmul.f32 %v494, %v468
          %v497 = vmul.f32 %v495, %v483
          %v498 = vadd.f32 %v496, 0.2548296
          %v499 = vadd.f32 %v497, 0.2548296
          %v500 = vmul.f32 %v498, %v468
          %v501 = vmul.f32 %v499, %v483
          %v502 = vsub.f32 0.0, %v448
          %v503 = vsub.f32 0.0, %v449
          %v504 = vmul.f32 %v502, %v448
          %v505 = vmul.f32 %v503, %v449
          %v506 = vmul.f32 %v504, 1.442695
          %v507 = vpow.pop %v506
          %v508 = vmul.f32 %v505, 1.442695
          %v509 = vpow.pop %v508
          %v510 = vmul.f32 %v500, %v507
          %v511 = vmul.f32 %v501, %v509
          %v512 = vsub.f32 1.0, %v510
          %v513 = vsub.f32 1.0, %v511
          %v514 = vmul.f32 %v446, %v512
          %v515 = vmul.f32 %v447, %v513
          %v516 = vadd.f32 %v514, 1.0
          %v517 = vadd.f32 %v515, 1.0
          %v518 = vmul.f32 %v440, %v516
          %v519 = vmul.f32 %v441, %v517
          %v520 = vsel %vm410, %v518, 0.0
          %521 = vadd.xlane.f32.xlu0 %v520
          %v522 = vpop.xlane.xlu0 %521
          %v523 = vsel %vm410, %v519, 0.0
          %524 = vadd.xlane.f32.xlu0 %v523
          %v525 = vpop.xlane.xlu0 %524
          %v526 = vrcp.pop 32.0
          %v527 = vmul.f32 32.0, %v526
          %v528 = vsub.f32 1.0, %v527
          %v529 = vmul.f32 %v526, %v528
          %v530 = vadd.f32 %v526, %v529
          %vm531 = vweird.f32 %v526
          %v532 = vsel %vm531, %v526, %v530
          %v533 = vmul.f32 %v522, %v532
          %v534 = vmul.f32 %v525, %v532
          %v535 = vsub.f32 %v518, %v533
          %v536 = vsub.f32 %v519, %v534
          %v537 = vmul.f32 %v535, %v535
          %v538 = vmul.f32 %v536, %v536
          %v539 = vsel %vm410, %v537, 0.0
          %540 = vadd.xlane.f32.xlu0 %v539
          %v541 = vpop.xlane.xlu0 %540
          %v542 = vsel %vm410, %v538, 0.0
          %543 = vadd.xlane.f32.xlu0 %v542
          %v544 = vpop.xlane.xlu0 %543
          %v545 = vmul.f32 %v541, %v532
          %v546 = vmul.f32 %v544, %v532
          %v547 = vadd.f32 %v545, 1e-12
          %v548 = vadd.f32 %v546, 1e-12
          %v549 = vrsqrt.pop %v547
          %v550 = vmul.f32 %v549, %v547
          %v551 = vmul.f32 %v550, %v549
          %v552 = vmul.f32 0.5, %v551
          %v553 = vsub.f32 1.5, %v552
          %v554 = vmul.f32 %v549, %v553
          %vm555 = vweird.f32 %v547
          %vm556 = vweird.f32 %v549
          %vm557 = vmor %vm555, %vm556
          %v558 = vsel %vm557, %v549, %v554
          %v559 = vrsqrt.pop %v548
          %v560 = vmul.f32 %v559, %v548
          %v561 = vmul.f32 %v560, %v559
          %v562 = vmul.f32 0.5, %v561
          %v563 = vsub.f32 1.5, %v562
          %v564 = vmul.f32 %v559, %v563
          %vm565 = vweird.f32 %v548
          %vm566 = vweird.f32 %v559
          %vm567 = vmor %vm565, %vm566
          %v568 = vsel %vm567, %v559, %v564
          %v569 = vmul.f32 %v535, %v558
          %v570 = vmul.f32 %v536, %v568
          %v571 = vld [vmem:[#allocation8] sm:$0x1]
          %v573 = vperm.slane %v571, 0
          %v575 = vmul.f32 %v569, %v573
          %v576 = vmul.f32 %v570, %v573
          %v577 = vld [vmem:[#allocation9] sm:$0x1]
          %v579 = vperm.slane %v577, 0
          %v581 = vadd.f32 %v575, %v579
          %v582 = vadd.f32 %v576, %v579
          %583 = vst.msk [vmem:[#allocation2] sm:$0xff] %vm410, %v581
          %584 = vst.msk [vmem:[#allocation2 + $0x8] sm:$0xff] %vm410, %v582
        $region72: #{tpu_custom_call.1} parent=47 // pred_fallthru
          _
        %v585 = vld [vmem:[#allocation2] sm:$0xff]
        %v586 = vld [vmem:[#allocation2 + $0x8] sm:$0xff]
        %v587 = vld [vmem:[%s356] sm:$0xff]
        %v588 = vld [vmem:[%s356 + $0x8] sm:$0xff]
        %v589 = vld [vmem:[%s356 + $0x10] sm:$0xff]
        %v590 = vld [vmem:[%s356 + $0x18] sm:$0xff]
        %v591 = vld [vmem:[%s394] sm:$0x1]
        %v593 = vperm.slane %v591, 0
        %vm595 = vcmask 261120
        %v597 = vsel %vm595, %v585, 0
        %v600 = vsel %vm595, %v586, 0
        %602 = vmatpush.msra.mxu0 0.0
        %603 = vmatpush.msra.mxu0 0.0
        %604 = vmatpush.msra.mxu0 0.0
        %605 = vmatpush.msra.mxu0 0.0
        %606 = vmatpush.msra.mxu0 0.0
        %607 = vmatpush.msra.mxu0 0.0
        %608 = vmatpush.msra.mxu0 0.0
        %609 = vmatpush.msra.mxu0 0.0
        %610 = vmatpush.msra.mxu0 0.0
        %611 = vmatpush.msra.mxu0 0.0
        %612 = vmatpush.msra.mxu0 0.0
        %613 = vmatpush.msra.mxu0 0.0
        %614 = vmatpush.msra.mxu0 %v590
        %615 = vmatpush.msra.mxu0 %v589
        %616 = vmatpush.msra.mxu0 %v588
        %617 = vmatpush.msra.mxu0 %v587
        %618 = vmatmul.f32.gmra.mxu0 %v597
        %v619 = vpop.f32.mrf.mxu0
        %v620 = vadd.f32 %v593, %v619
        %621 = vmatmul.f32.gmra.mxu0 %v600
        %v622 = vpop.f32.mrf.mxu0
        %v623 = vadd.f32 %v593, %v622
        %624 = vdwg.mxu0
        %625 = vst [vmem:[%s390] sm:$0xff] %v620
        %626 = vst [vmem:[%s390 + $0x8] sm:$0xff] %v623
        %s627 = sand.u32 %s208, 1
        %s628 = scalar_lea.sflag [#allocation5], %s627
        %s629 = sand.u32 %s208, 1
        %s630 = smul.addr %s629, 16
        %s631 = scalar_lea.vmem [#allocation12], %s630
        // Predicated region
        $region73: #{tpu_custom_call.1} parent=47 // pred_check
          %p632 = pneg %p218
        $region74: #{tpu_custom_call.1} parent=47 // pred_check_branch
          %634 = sbr.rel (%p632) target = $region76
        $region75: #{tpu_custom_call.1} parent=47 // pred_region
          %s635 = smul.u32 2, %s28
          %637 = vsyncadd %s628, 0
          %s638 = smul.addr %s635, 4
          %s639 = sadd.s32 %s29, %s638
          %s640 = smul.addr %s639, 8
          %s641 = scalar_lea.hbm %s7, %s640
          %s642 = sshll.u32 %s631, 4
          %s643 = int_to_ptr.vmem [resolvable:$true] %s642
          %s644 = sshll.u32 %s641, 4
          %s645 = int_to_ptr.hbm [resolvable:$true] %s644
          %650 = dma.vmem_to_hbm [thread:$0]  %s643, 256, %s645, %s628, 128, 512, 8
        $region76: #{tpu_custom_call.1} parent=47 // pred_fallthru
          _
      $region48: #{tpu_custom_call.1} parent=5 // pred_fallthru
        _
      %p651 = scmp.le.s32.totalorder 2, %s19
      // Predicated region
      $region77: #{tpu_custom_call.1} parent=5 // pred_check
        %p652 = pneg %p651
      $region78: #{tpu_custom_call.1} parent=5 // pred_check_branch
        %654 = sbr.rel (%p652) target = $region80
      $region79: #{tpu_custom_call.1} parent=5 // pred_region
        %s655 = ssub.s32 %s19, 2
        // Predicated region
        $region81: #{tpu_custom_call.1} parent=79 // pred_check
          %p656 = pneg %p224
        $region82: #{tpu_custom_call.1} parent=79 // pred_check_branch
          %658 = sbr.rel (%p656) target = $region84
        $region83: #{tpu_custom_call.1} parent=79 // pred_region
          %s659 = sand.u32 %s209, 1
          %s660 = scalar_lea.sflag [#allocation5], %s659
          %s661 = sand.u32 %s209, 1
          %s662 = smul.addr %s661, 16
          %s663 = scalar_lea.vmem [#allocation12], %s662
          %665 = dma.done %s660, 256
        $region84: #{tpu_custom_call.1} parent=79 // pred_fallthru
          _
      $region80: #{tpu_custom_call.1} parent=5 // pred_fallthru
        _
    $region6: #{tpu_custom_call.1} parent=1 // loop_footer
      %s23 = sadd.s32 1, %s19
    $region7: #{tpu_custom_call.1} parent=1 // loop_footer_branch
      %18 = sbr.rel target = $region3
    $region8: #{tpu_custom_call.1} parent=1 // loop_exit
      _
    %666 = vsyncpa [#allocation4], 1
    %s667 = scalar_lea.sflag [#allocation4], 1
    %668 = vsyncpa %s667, 1
    %669 = vsyncpa [#allocation7], 1
    %670 = vsyncpa [#allocation10], 1
    %671 = vsyncpa [#allocation5], 1
    %s672 = scalar_lea.sflag [#allocation5], 1
    %673 = vsyncpa %s672, 1

</llo_original>
